<compile_context>
chip_gen: v5e
topology: v5e:2x2
jax: 0.10.0
libtpu: 0.0.40
codegen_flags: <defaults>
</compile_context>

<pallas_src>
import jax
import jax.numpy as jnp
from jax.experimental import pallas as pl
from jax.experimental.pallas import tpu as pltpu

_SUBLANE = 8


def _round_up(n, m):
    return ((n + m - 1) // m) * m


def _pick_block_b(B):
    """Batch tile: >=2 programs when B>=16 (v7x megacore), capped at 512."""
    if B < 16:
        return B
    half = _round_up(pl.cdiv(B, 2), _SUBLANE)
    return min(half, 512)


def _make_kernel(num_linears):
    def kernel(x_ref, *refs):
        # refs = (w0, b0, w1, b1, ..., out_ref)
        out_ref = refs[-1]
        params = refs[:-1]

        h = x_ref[...].astype(jnp.bfloat16)        # cast once, carry bf16
        for l in range(num_linears):
            w = params[2 * l][...]                 # bf16 [K_l, N_l]
            b = params[2 * l + 1][...]             # f32  [1, N_l]
            z = jnp.dot(h, w, preferred_element_type=jnp.float32) + b
            if l != num_linears - 1:
                # tanh in f32 (EUP), store bf16 for the next MXU pass.
                h = jnp.tanh(z).astype(jnp.bfloat16)
            else:
                out_ref[...] = z.astype(out_ref.dtype)

    return kernel


def prepare_params(weights, biases):
    """One-time prep: bf16 weights, (1, N) f32 biases. Reuse across calls.

    weights[l]: [in_l, out_l] float32 (transposed vs. torch.nn.Linear.weight)
    biases[l]:  [out_l] float32
    """
    ws = [jnp.asarray(w, jnp.float32).astype(jnp.bfloat16) for w in weights]
    bs = [jnp.asarray(b, jnp.float32).reshape(1, -1) for b in biases]
    return ws, bs


def mlp_forward(x, ws, bs, *, block_b=None):
    """MLP forward as one Pallas TPU kernel. ws/bs from prepare_params()."""
    num_linears = len(ws)
    B, input_dim = x.shape
    assert ws[0].shape[0] == input_dim
    output_dim = ws[-1].shape[1]

    # ---- batch tiling (only padding that ever happens, and only if needed) --
    if block_b is None:
        block_b = _pick_block_b(B)
    assert block_b == B or block_b % _SUBLANE == 0, "block_b must be 8-aligned"
    B_p = _round_up(B, block_b)
    x_p = x.astype(jnp.float32)
    if B_p != B:
        x_p = jnp.pad(x_p, ((0, B_p - B), (0, 0)))
    grid = (B_p // block_b,)

    # ---- specs --------------------------------------------------------------
    in_specs = [pl.BlockSpec((block_b, input_dim), lambda i: (i, 0))]
    params_flat = []
    for w, b in zip(ws, bs):
        # Grid-invariant: fetched once, single-buffered (no wasted 2nd buffer).
        in_specs.append(pl.BlockSpec(w.shape, lambda i: (0, 0),
                                     pipeline_mode=pl.Buffered(1)))
        in_specs.append(pl.BlockSpec(b.shape, lambda i: (0, 0),
                                     pipeline_mode=pl.Buffered(1)))
        params_flat += [w, b]
    out_specs = pl.BlockSpec((block_b, output_dim), lambda i: (i, 0))

    # ---- explicit VMEM budget (generation-aware cap) ------------------------
    dims = [input_dim] + [w.shape[1] for w in ws]
    vmem_bytes = (2 * block_b * input_dim * 4            # x tiles (dbl-buffered)
                  + 2 * block_b * output_dim * 4         # out tiles
                  + sum(w.size * 2 for w in ws)          # bf16 weights, 1 buffer
                  + sum(b.size * 4 for b in bs)          # f32 biases, 1 buffer
                  + 4 * block_b * max(dims) * 4)         # live activations
    vmem_limit = int(min(max(2 * vmem_bytes, 32 << 20), 64 << 20))

    # ---- advisory cost estimate for the XLA scheduler -----------------------
    flops = 2 * B_p * sum(dims[l] * dims[l + 1] for l in range(num_linears))
    transcendentals = B_p * sum(dims[l + 1] for l in range(num_linears - 1))
    bytes_accessed = (x_p.size * 4
                      + sum(w.size * 2 for w in ws)
                      + sum(b.size * 4 for b in bs)
                      + B_p * output_dim * 4)
    cost = pl.CostEstimate(flops=flops,
                           transcendentals=transcendentals,
                           bytes_accessed=bytes_accessed)

    out_p = pl.pallas_call(
        _make_kernel(num_linears),
        out_shape=jax.ShapeDtypeStruct((B_p, output_dim), jnp.float32),
        grid_spec=pltpu.PrefetchScalarGridSpec(
            num_scalar_prefetch=0,
            grid=grid,
            in_specs=in_specs,
            out_specs=out_specs),
        compiler_params=pltpu.CompilerParams(
            dimension_semantics=("parallel",),
            vmem_limit_bytes=vmem_limit),
        cost_estimate=cost,
    )(x_p, *params_flat)

    return out_p[:B]


def init_mlp_params(key, input_dim, output_dim, hidden_dim, num_layers):
    """PyTorch nn.Linear-style init: uniform +/- 1/sqrt(fan_in)."""
    dims = [input_dim] + [hidden_dim] * (num_layers - 1) + [output_dim]
    weights, biases = [], []
    keys = jax.random.split(key, num_layers)
    for l in range(num_layers):
        kw, kb = jax.random.split(keys[l])
        bound = 1.0 / float(dims[l]) ** 0.5
        w = jax.random.uniform(kw, (dims[l], dims[l + 1]), jnp.float32,
                               -bound, bound)
        b = jax.random.uniform(kb, (dims[l + 1],), jnp.float32, -bound, bound)
        weights.append(w)
        biases.append(b)
    return weights, biases


def reference_forward(x, weights, biases, *, bf16_dots=False):
    """Pure-JAX reference (f32, or with the kernel's exact bf16 recipe)."""
    n = len(weights)
    if bf16_dots:
        h = x.astype(jnp.bfloat16)
        for l, (w, b) in enumerate(zip(weights, biases)):
            z = jnp.dot(h, w.astype(jnp.bfloat16),
                        preferred_element_type=jnp.float32) + b
            if l != n - 1:
                h = jnp.tanh(z).astype(jnp.bfloat16)
            else:
                return z
    else:
        h = x
        for l, (w, b) in enumerate(zip(weights, biases)):
            h = h @ w + b
            if l != n - 1:
                h = jnp.tanh(h)
        return h


if __name__ == "__main__":
    # Small shapes consistent with the module's forward.
    B = 256            # -> block_b=128, 2 grid programs (feeds both v7x TCs)
    input_dim = 16
    hidden_dim = 64
    output_dim = 10
    num_layers = 3     # Linear(16,64)+Tanh, Linear(64,64)+Tanh, Linear(64,10)

    key = jax.random.PRNGKey(0)
    kx, kp = jax.random.split(key)
    x = jax.random.normal(kx, (B, input_dim), jnp.float32)
    weights, biases = init_mlp_params(kp, input_dim, output_dim, hidden_dim,
                                      num_layers)

    # One-time param prep (hoisted out of the forward path).
    ws, bs = prepare_params(weights, biases)
    ws = jax.block_until_ready(ws)

    out = mlp_forward(x, ws, bs)
    out = jax.block_until_ready(out)
    assert out.shape == (B, output_dim)

    # Exact-recipe check (bf16 MXU inputs / bf16 carried activations,
    # f32 accumulation).
    ref_bf16 = reference_forward(x, weights, biases, bf16_dots=True)
    assert jnp.allclose(out, ref_bf16, atol=2e-3, rtol=2e-3)

    # Sanity vs. the pure-f32 PyTorch semantics (loose tol for bf16 inputs).
    ref_f32 = reference_forward(x, weights, biases, bf16_dots=False)
    assert jnp.allclose(out, ref_f32, atol=5e-2, rtol=5e-2)

    print("KERNEL_OK")
</pallas_src>

<mosaic_0001>
module attributes {stable_mosaic.version = 11 : i64} {
  func.func @kernel(%arg0: i32, %arg1: memref<128x16xf32, #tpu.memory_space<vmem>>, %arg2: memref<16x64xbf16, #tpu.memory_space<vmem>>, %arg3: memref<1x64xf32, #tpu.memory_space<vmem>>, %arg4: memref<64x64xbf16, #tpu.memory_space<vmem>>, %arg5: memref<1x64xf32, #tpu.memory_space<vmem>>, %arg6: memref<64x10xbf16, #tpu.memory_space<vmem>>, %arg7: memref<1x10xf32, #tpu.memory_space<vmem>>, %arg8: memref<128x10xf32, #tpu.memory_space<vmem>>) attributes {dimension_semantics = [#tpu.dimension_semantics<parallel>], iteration_bounds = array<i64: 2>, scalar_prefetch = 0 : i64, scratch_operands = 0 : i64, tpu.core_type = #tpu.core_type<tc>, window_params = [{transform_indices = @transform_0, window_bounds = array<i64: 128, 16>}, {pipeline_mode = #tpu.pipeline_mode<synchronous>, transform_indices = @transform_1, window_bounds = array<i64: 16, 64>}, {pipeline_mode = #tpu.pipeline_mode<synchronous>, transform_indices = @transform_2, window_bounds = array<i64: 1, 64>}, {pipeline_mode = #tpu.pipeline_mode<synchronous>, transform_indices = @transform_3, window_bounds = array<i64: 64, 64>}, {pipeline_mode = #tpu.pipeline_mode<synchronous>, transform_indices = @transform_4, window_bounds = array<i64: 1, 64>}, {pipeline_mode = #tpu.pipeline_mode<synchronous>, transform_indices = @transform_5, window_bounds = array<i64: 64, 10>}, {pipeline_mode = #tpu.pipeline_mode<synchronous>, transform_indices = @transform_6, window_bounds = array<i64: 1, 10>}, {transform_indices = @transform_7, window_bounds = array<i64: 128, 10>}]} {
    %c0 = arith.constant 0 : index
    %c0_0 = arith.constant 0 : index
    %0 = vector.load %arg1[%c0, %c0_0] : memref<128x16xf32, #tpu.memory_space<vmem>>, vector<128x16xf32>
    %1 = arith.truncf %0 : vector<128x16xf32> to vector<128x16xbf16>
    %c0_1 = arith.constant 0 : index
    %c0_2 = arith.constant 0 : index
    %2 = vector.load %arg2[%c0_1, %c0_2] : memref<16x64xbf16, #tpu.memory_space<vmem>>, vector<16x64xbf16>
    %c0_3 = arith.constant 0 : index
    %c0_4 = arith.constant 0 : index
    %3 = vector.load %arg3[%c0_3, %c0_4] : memref<1x64xf32, #tpu.memory_space<vmem>>, vector<1x64xf32>
    %cst = arith.constant dense<0.000000e+00> : vector<128x64xf32>
    %4 = tpu.matmul %1, %2, %cst {dimension_numbers = #tpu.dot_dimension_numbers<[1], [0], [0], [1], [0, 0, 1, 1], [], []>} : vector<128x16xbf16>, vector<16x64xbf16>, vector<128x64xf32> -> vector<128x64xf32>
    %5 = vector.broadcast %3 : vector<1x64xf32> to vector<128x64xf32>
    %6 = arith.addf %4, %5 : vector<128x64xf32>
    %7 = math.tanh %6 : vector<128x64xf32>
    %8 = arith.truncf %7 : vector<128x64xf32> to vector<128x64xbf16>
    %c0_5 = arith.constant 0 : index
    %c0_6 = arith.constant 0 : index
    %9 = vector.load %arg4[%c0_5, %c0_6] : memref<64x64xbf16, #tpu.memory_space<vmem>>, vector<64x64xbf16>
    %c0_7 = arith.constant 0 : index
    %c0_8 = arith.constant 0 : index
    %10 = vector.load %arg5[%c0_7, %c0_8] : memref<1x64xf32, #tpu.memory_space<vmem>>, vector<1x64xf32>
    %cst_9 = arith.constant dense<0.000000e+00> : vector<128x64xf32>
    %11 = tpu.matmul %8, %9, %cst_9 {dimension_numbers = #tpu.dot_dimension_numbers<[1], [0], [0], [1], [0, 0, 1, 1], [], []>} : vector<128x64xbf16>, vector<64x64xbf16>, vector<128x64xf32> -> vector<128x64xf32>
    %12 = vector.broadcast %10 : vector<1x64xf32> to vector<128x64xf32>
    %13 = arith.addf %11, %12 : vector<128x64xf32>
    %14 = math.tanh %13 : vector<128x64xf32>
    %15 = arith.truncf %14 : vector<128x64xf32> to vector<128x64xbf16>
    %c0_10 = arith.constant 0 : index
    %c0_11 = arith.constant 0 : index
    %16 = vector.load %arg6[%c0_10, %c0_11] : memref<64x10xbf16, #tpu.memory_space<vmem>>, vector<64x10xbf16>
    %c0_12 = arith.constant 0 : index
    %c0_13 = arith.constant 0 : index
    %17 = vector.load %arg7[%c0_12, %c0_13] : memref<1x10xf32, #tpu.memory_space<vmem>>, vector<1x10xf32>
    %cst_14 = arith.constant dense<0.000000e+00> : vector<128x10xf32>
    %18 = tpu.matmul %15, %16, %cst_14 {dimension_numbers = #tpu.dot_dimension_numbers<[1], [0], [0], [1], [0, 0, 1, 1], [], []>} : vector<128x64xbf16>, vector<64x10xbf16>, vector<128x10xf32> -> vector<128x10xf32>
    %19 = vector.broadcast %17 : vector<1x10xf32> to vector<128x10xf32>
    %20 = arith.addf %18, %19 : vector<128x10xf32>
    %c0_15 = arith.constant 0 : index
    %c0_16 = arith.constant 0 : index
    %21 = vector.load %arg8[%c0_15, %c0_16] : memref<128x10xf32, #tpu.memory_space<vmem>>, vector<128x10xf32>
    tpu.vector_store %arg8[%c0_15, %c0_16], %20 {strides = array<i32>} : memref<128x10xf32, #tpu.memory_space<vmem>>, vector<128x10xf32>,
    return
  }
  func.func @transform_0(%arg0: i32) -> (i32, i32) {
    %c0_i32 = arith.constant 0 : i32
    %c0_i32_0 = arith.constant 0 : i32
    return %arg0, %c0_i32 : i32, i32
  }
  func.func @transform_1(%arg0: i32) -> (i32, i32) {
    %c0_i32 = arith.constant 0 : i32
    %c0_i32_0 = arith.constant 0 : i32
    %c0_i32_1 = arith.constant 0 : i32
    return %c0_i32, %c0_i32_0 : i32, i32
  }
  func.func @transform_2(%arg0: i32) -> (i32, i32) {
    %c0_i32 = arith.constant 0 : i32
    %c0_i32_0 = arith.constant 0 : i32
    %c0_i32_1 = arith.constant 0 : i32
    return %c0_i32, %c0_i32_0 : i32, i32
  }
  func.func @transform_3(%arg0: i32) -> (i32, i32) {
    %c0_i32 = arith.constant 0 : i32
    %c0_i32_0 = arith.constant 0 : i32
    %c0_i32_1 = arith.constant 0 : i32
    return %c0_i32, %c0_i32_0 : i32, i32
  }
  func.func @transform_4(%arg0: i32) -> (i32, i32) {
    %c0_i32 = arith.constant 0 : i32
    %c0_i32_0 = arith.constant 0 : i32
    %c0_i32_1 = arith.constant 0 : i32
    return %c0_i32, %c0_i32_0 : i32, i32
  }
  func.func @transform_5(%arg0: i32) -> (i32, i32) {
    %c0_i32 = arith.constant 0 : i32
    %c0_i32_0 = arith.constant 0 : i32
    %c0_i32_1 = arith.constant 0 : i32
    return %c0_i32, %c0_i32_0 : i32, i32
  }
  func.func @transform_6(%arg0: i32) -> (i32, i32) {
    %c0_i32 = arith.constant 0 : i32
    %c0_i32_0 = arith.constant 0 : i32
    %c0_i32_1 = arith.constant 0 : i32
    return %c0_i32, %c0_i32_0 : i32, i32
  }
  func.func @transform_7(%arg0: i32) -> (i32, i32) {
    %c0_i32 = arith.constant 0 : i32
    %c0_i32_0 = arith.constant 0 : i32
    return %arg0, %c0_i32 : i32, i32
  }
}

</mosaic_0001>

<llo_original>
// kernel: tpu_custom_call.1
$region0: #{tpu_custom_call.1}
  #allocation0 [shape = 'u32[]', space=smem, size = 0x4, offset = 0x4, fixed_abs, tag = 'smem constant byte address 0x4 - core index']
  #allocation1 [shape = 'u32[72,128]{1,0:T(1,128)}', space=vmem, size = 0x9000, scoped, tag = 'internal scratch']
  %s0 = inlined_call_operand.vmem [shape: f32[256,16], index: 0, kind: input, shape index: {}]
  %s1 = inlined_call_operand.vmem [shape: bf16[16,64], index: 1, kind: input, shape index: {}]
  %s2 = inlined_call_operand.vmem [shape: f32[1,64], index: 2, kind: input, shape index: {}]
  %s3 = inlined_call_operand.vmem [shape: bf16[64,64], index: 3, kind: input, shape index: {}]
  %s4 = inlined_call_operand.vmem [shape: f32[1,64], index: 4, kind: input, shape index: {}]
  %s5 = inlined_call_operand.vmem [shape: bf16[64,10], index: 5, kind: input, shape index: {}]
  %s6 = inlined_call_operand.vmem [shape: f32[1,10], index: 6, kind: input, shape index: {}]
  %s7 = inlined_call_operand.vmem [shape: f32[256,10], index: 7, kind: output, shape index: {}]
  %s8 = sld [smem:[#allocation0]]
  $region61: #{tpu_custom_call.1} parent=0
    _
  %s10 = ssub.s32 1, %s8
  %s11 = scalar_select 0, %s10, %s8
  loop: start=0, step=1, limit=4
  $region2: #{tpu_custom_call.1} parent=0 // loop_pre_header
    _
  $region3: #{tpu_custom_call.1} parent=0 // loop_header
    %s13 = sphi 0, %s17
    %p14 = scmp.ge.s32.totalorder %s13, 4
    %s23 = sphi 0, %s25
    %s26 = sphi 0, %s23
    %s27 = sphi 0, %s26
    %s43 = sphi 0, %s27
    %s47 = sphi 0, %s47
    %s49 = sphi 0, %s47
    %s50 = sphi 0, %s49
    %s64 = sphi 0, %s50
    %s68 = sphi 0, %s68
    %s70 = sphi 0, %s68
    %s71 = sphi 0, %s70
    %s85 = sphi 0, %s71
    %s89 = sphi 0, %s89
    %s91 = sphi 0, %s89
    %s92 = sphi 0, %s91
    %s106 = sphi 0, %s92
    %s110 = sphi 0, %s110
    %s112 = sphi 0, %s110
    %s113 = sphi 0, %s112
    %s127 = sphi 0, %s113
    %s131 = sphi 0, %s131
    %s133 = sphi 0, %s131
    %s134 = sphi 0, %s133
    %s148 = sphi 0, %s134
    %s152 = sphi 0, %s152
    %s154 = sphi 0, %s152
    %s155 = sphi 0, %s154
    %s169 = sphi 0, %s155
    %s175 = sphi 0, %s177
    %s178 = sphi 0, %s175
    %s179 = sphi 0, %s178
    %s195 = sphi 0, %s179
  $region4: #{tpu_custom_call.1} parent=0 // loop_header_branch
    %16 = sbr.rel (%p14) target = $region8
  $region5: #{tpu_custom_call.1} parent=0 // loop_body
    %s18 = ssub.s32 %s13, 1
    %s19 = ssub.s32 %s13, 2
    %s20 = sadd.s32 %s13, 1
    %s21 = ssub.s32 %s13, %s20
    %p22 = scmp.eq.s32.totalorder %s21, 0
    %s24 = sadd.s32 %s23, 1
    %s25 = scalar_select %p22, %s23, %s24
    %p28 = pneg %p22
    %p29 = scmp.eq.s32.totalorder %s13, 1
    %p30 = por %p28, %p29
    %p31 = scmp.ne.s32.totalorder %s23, %s26
    %p32 = scmp.eq.s32.totalorder %s13, 0
    %p33 = por %p31, %p32
    %p34 = scmp.ne.s32.totalorder %s23, %s26
    %p35 = scmp.eq.s32.totalorder %s18, 1
    %p36 = por %p34, %p35
    %p37 = scmp.ne.s32.totalorder %s26, %s27
    %p38 = scmp.eq.s32.totalorder %s18, 0
    %p39 = por %p37, %p38
    %p40 = scmp.ne.s32.totalorder %s26, %s27
    %p41 = scmp.eq.s32.totalorder %s19, 1
    %p42 = por %p40, %p41
    %p44 = scmp.ne.s32.totalorder %s27, %s43
    %p45 = scmp.eq.s32.totalorder %s19, 0
    %p46 = por %p44, %p45
    %s48 = sadd.s32 %s47, 1
    %p51 = scmp.eq.s32.totalorder %s13, 1
    %p52 = scmp.ne.s32.totalorder %s47, %s49
    %p53 = scmp.eq.s32.totalorder %s13, 0
    %p54 = por %p52, %p53
    %p55 = scmp.ne.s32.totalorder %s47, %s49
    %p56 = scmp.eq.s32.totalorder %s18, 1
    %p57 = por %p55, %p56
    %p58 = scmp.ne.s32.totalorder %s49, %s50
    %p59 = scmp.eq.s32.totalorder %s18, 0
    %p60 = por %p58, %p59
    %p61 = scmp.ne.s32.totalorder %s49, %s50
    %p62 = scmp.eq.s32.totalorder %s19, 1
    %p63 = por %p61, %p62
    %p65 = scmp.ne.s32.totalorder %s50, %s64
    %p66 = scmp.eq.s32.totalorder %s19, 0
    %p67 = por %p65, %p66
    %s69 = sadd.s32 %s68, 1
    %p72 = scmp.eq.s32.totalorder %s13, 1
    %p73 = scmp.ne.s32.totalorder %s68, %s70
    %p74 = scmp.eq.s32.totalorder %s13, 0
    %p75 = por %p73, %p74
    %p76 = scmp.ne.s32.totalorder %s68, %s70
    %p77 = scmp.eq.s32.totalorder %s18, 1
    %p78 = por %p76, %p77
    %p79 = scmp.ne.s32.totalorder %s70, %s71
    %p80 = scmp.eq.s32.totalorder %s18, 0
    %p81 = por %p79, %p80
    %p82 = scmp.ne.s32.totalorder %s70, %s71
    %p83 = scmp.eq.s32.totalorder %s19, 1
    %p84 = por %p82, %p83
    %p86 = scmp.ne.s32.totalorder %s71, %s85
    %p87 = scmp.eq.s32.totalorder %s19, 0
    %p88 = por %p86, %p87
    %s90 = sadd.s32 %s89, 1
    %p93 = scmp.eq.s32.totalorder %s13, 1
    %p94 = scmp.ne.s32.totalorder %s89, %s91
    %p95 = scmp.eq.s32.totalorder %s13, 0
    %p96 = por %p94, %p95
    %p97 = scmp.ne.s32.totalorder %s89, %s91
    %p98 = scmp.eq.s32.totalorder %s18, 1
    %p99 = por %p97, %p98
    %p100 = scmp.ne.s32.totalorder %s91, %s92
    %p101 = scmp.eq.s32.totalorder %s18, 0
    %p102 = por %p100, %p101
    %p103 = scmp.ne.s32.totalorder %s91, %s92
    %p104 = scmp.eq.s32.totalorder %s19, 1
    %p105 = por %p103, %p104
    %p107 = scmp.ne.s32.totalorder %s92, %s106
    %p108 = scmp.eq.s32.totalorder %s19, 0
    %p109 = por %p107, %p108
    %s111 = sadd.s32 %s110, 1
    %p114 = scmp.eq.s32.totalorder %s13, 1
    %p115 = scmp.ne.s32.totalorder %s110, %s112
    %p116 = scmp.eq.s32.totalorder %s13, 0
    %p117 = por %p115, %p116
    %p118 = scmp.ne.s32.totalorder %s110, %s112
    %p119 = scmp.eq.s32.totalorder %s18, 1
    %p120 = por %p118, %p119
    %p121 = scmp.ne.s32.totalorder %s112, %s113
    %p122 = scmp.eq.s32.totalorder %s18, 0
    %p123 = por %p121, %p122
    %p124 = scmp.ne.s32.totalorder %s112, %s113
    %p125 = scmp.eq.s32.totalorder %s19, 1
    %p126 = por %p124, %p125
    %p128 = scmp.ne.s32.totalorder %s113, %s127
    %p129 = scmp.eq.s32.totalorder %s19, 0
    %p130 = por %p128, %p129
    %s132 = sadd.s32 %s131, 1
    %p135 = scmp.eq.s32.totalorder %s13, 1
    %p136 = scmp.ne.s32.totalorder %s131, %s133
    %p137 = scmp.eq.s32.totalorder %s13, 0
    %p138 = por %p136, %p137
    %p139 = scmp.ne.s32.totalorder %s131, %s133
    %p140 = scmp.eq.s32.totalorder %s18, 1
    %p141 = por %p139, %p140
    %p142 = scmp.ne.s32.totalorder %s133, %s134
    %p143 = scmp.eq.s32.totalorder %s18, 0
    %p144 = por %p142, %p143
    %p145 = scmp.ne.s32.totalorder %s133, %s134
    %p146 = scmp.eq.s32.totalorder %s19, 1
    %p147 = por %p145, %p146
    %p149 = scmp.ne.s32.totalorder %s134, %s148
    %p150 = scmp.eq.s32.totalorder %s19, 0
    %p151 = por %p149, %p150
    %s153 = sadd.s32 %s152, 1
    %p156 = scmp.eq.s32.totalorder %s13, 1
    %p157 = scmp.ne.s32.totalorder %s152, %s154
    %p158 = scmp.eq.s32.totalorder %s13, 0
    %p159 = por %p157, %p158
    %p160 = scmp.ne.s32.totalorder %s152, %s154
    %p161 = scmp.eq.s32.totalorder %s18, 1
    %p162 = por %p160, %p161
    %p163 = scmp.ne.s32.totalorder %s154, %s155
    %p164 = scmp.eq.s32.totalorder %s18, 0
    %p165 = por %p163, %p164
    %p166 = scmp.ne.s32.totalorder %s154, %s155
    %p167 = scmp.eq.s32.totalorder %s19, 1
    %p168 = por %p166, %p167
    %p170 = scmp.ne.s32.totalorder %s155, %s169
    %p171 = scmp.eq.s32.totalorder %s19, 0
    %p172 = por %p170, %p171
    %s173 = ssub.s32 %s13, %s20
    %p174 = scmp.eq.s32.totalorder %s173, 0
    %s176 = sadd.s32 %s175, 1
    %s177 = scalar_select %p174, %s175, %s176
    %p180 = pneg %p174
    %p181 = scmp.eq.s32.totalorder %s13, 1
    %p182 = por %p180, %p181
    %p183 = scmp.ne.s32.totalorder %s175, %s178
    %p184 = scmp.eq.s32.totalorder %s13, 0
    %p185 = por %p183, %p184
    %p186 = scmp.ne.s32.totalorder %s175, %s178
    %p187 = scmp.eq.s32.totalorder %s18, 1
    %p188 = por %p186, %p187
    %p189 = scmp.ne.s32.totalorder %s178, %s179
    %p190 = scmp.eq.s32.totalorder %s18, 0
    %p191 = por %p189, %p190
    %p192 = scmp.ne.s32.totalorder %s178, %s179
    %p193 = scmp.eq.s32.totalorder %s19, 1
    %p194 = por %p192, %p193
    %p196 = scmp.ne.s32.totalorder %s179, %s195
    %p197 = scmp.eq.s32.totalorder %s19, 0
    %p198 = por %p196, %p197
    %p199 = scmp.le.s32.totalorder 1, %s13
    %p200 = scmp.lt.s32.totalorder %s13, 3
    %p201 = pnand %p199, %p200
    %p202 = pneg %p201
    // Predicated region
    $region9: #{tpu_custom_call.1} parent=5 // pred_check
      _
    $region10: #{tpu_custom_call.1} parent=5 // pred_check_branch
      %204 = sbr.rel (%p201) target = $region12
    $region11: #{tpu_custom_call.1} parent=5 // pred_region
      %s205 = ssub.s32 %s13, 1
      // Predicated region
      $region13: #{tpu_custom_call.1} parent=11 // pred_check
        %p206 = pneg %p60
      $region14: #{tpu_custom_call.1} parent=11 // pred_check_branch
        %208 = sbr.rel (%p206) target = $region16
      $region15: #{tpu_custom_call.1} parent=11 // pred_region
        _
      $region16: #{tpu_custom_call.1} parent=11 // pred_fallthru
        _
      // Predicated region
      $region17: #{tpu_custom_call.1} parent=11 // pred_check
        %p209 = pneg %p81
      $region18: #{tpu_custom_call.1} parent=11 // pred_check_branch
        %211 = sbr.rel (%p209) target = $region20
      $region19: #{tpu_custom_call.1} parent=11 // pred_region
        _
      $region20: #{tpu_custom_call.1} parent=11 // pred_fallthru
        _
      // Predicated region
      $region21: #{tpu_custom_call.1} parent=11 // pred_check
        %p212 = pneg %p102
      $region22: #{tpu_custom_call.1} parent=11 // pred_check_branch
        %214 = sbr.rel (%p212) target = $region24
      $region23: #{tpu_custom_call.1} parent=11 // pred_region
        _
      $region24: #{tpu_custom_call.1} parent=11 // pred_fallthru
        _
      // Predicated region
      $region25: #{tpu_custom_call.1} parent=11 // pred_check
        %p215 = pneg %p123
      $region26: #{tpu_custom_call.1} parent=11 // pred_check_branch
        %217 = sbr.rel (%p215) target = $region28
      $region27: #{tpu_custom_call.1} parent=11 // pred_region
        _
      $region28: #{tpu_custom_call.1} parent=11 // pred_fallthru
        _
      // Predicated region
      $region29: #{tpu_custom_call.1} parent=11 // pred_check
        %p218 = pneg %p144
      $region30: #{tpu_custom_call.1} parent=11 // pred_check_branch
        %220 = sbr.rel (%p218) target = $region32
      $region31: #{tpu_custom_call.1} parent=11 // pred_region
        _
      $region32: #{tpu_custom_call.1} parent=11 // pred_fallthru
        _
      // Predicated region
      $region33: #{tpu_custom_call.1} parent=11 // pred_check
        %p221 = pneg %p165
      $region34: #{tpu_custom_call.1} parent=11 // pred_check_branch
        %223 = sbr.rel (%p221) target = $region36
      $region35: #{tpu_custom_call.1} parent=11 // pred_region
        _
      $region36: #{tpu_custom_call.1} parent=11 // pred_fallthru
        _
    $region12: #{tpu_custom_call.1} parent=5 // pred_fallthru
      _
    %p224 = scmp.lt.s32.totalorder %s13, 2
    // Predicated region
    $region37: #{tpu_custom_call.1} parent=5 // pred_check
      %p225 = pneg %p224
    $region38: #{tpu_custom_call.1} parent=5 // pred_check_branch
      %227 = sbr.rel (%p225) target = $region40
    $region39: #{tpu_custom_call.1} parent=5 // pred_region
      // Predicated region
      $region41: #{tpu_custom_call.1} parent=39 // pred_check
        %p228 = pneg %p33
      $region42: #{tpu_custom_call.1} parent=39 // pred_check_branch
        %230 = sbr.rel (%p228) target = $region44
      $region43: #{tpu_custom_call.1} parent=39 // pred_region
        %s231 = smul.u32 16, %s13
        %p232 = scmp.lt.s32.totalorder %s231, 31
        %s233 = scalar_select %p232, %s231, 31
        %s234 = smul.addr %s233, 8
        %s235 = scalar_lea.vmem %s0, %s234
        %s236 = smul.u32 16, %s13
      $region44: #{tpu_custom_call.1} parent=39 // pred_fallthru
        _
    $region40: #{tpu_custom_call.1} parent=5 // pred_fallthru
      _
    %p237 = scmp.le.s32.totalorder 1, %s13
    %p238 = scmp.lt.s32.totalorder %s13, 3
    %p239 = pnand %p237, %p238
    %p240 = pneg %p239
    // Predicated region
    $region45: #{tpu_custom_call.1} parent=5 // pred_check
      _
    $region46: #{tpu_custom_call.1} parent=5 // pred_check_branch
      %242 = sbr.rel (%p239) target = $region48
    $region47: #{tpu_custom_call.1} parent=5 // pred_region
      %s243 = ssub.s32 %s13, 1
      %s244 = smul.u32 16, %s18
      %p245 = scmp.lt.s32.totalorder %s244, 31
      %s246 = scalar_select %p245, %s244, 31
      %s247 = smul.addr %s246, 8
      %s248 = scalar_lea.vmem %s0, %s247
      %p249 = pneg %p39
      %p250 = pneg %p36
      %p251 = pneg %p60
      %p252 = pneg %p57
      %p253 = pneg %p81
      %p254 = pneg %p78
      %p255 = pneg %p102
      %p256 = pneg %p99
      %p257 = pneg %p123
      %p258 = pneg %p120
      %p259 = pneg %p144
      %p260 = pneg %p141
      %p261 = pneg %p165
      %p262 = pneg %p162
      %p263 = pneg %p191
      %p264 = pneg %p188
      %s265 = smul.u32 16, %s18
      %p266 = scmp.lt.s32.totalorder %s265, 31
      %s267 = scalar_select %p266, %s265, 31
      %s268 = smul.addr %s267, 8
      %s269 = scalar_lea.vmem %s7, %s268
      %s270 = smul.u32 16, %s18
      %p271 = scmp.lt.s32.totalorder %s270, 31
      %s272 = scalar_select %p271, %s270, 31
      %s273 = smul.addr %s272, 8
      %s274 = scalar_lea.vmem %s0, %s273
      %s275 = smul.u32 16, %s18
      %s276 = smul.u32 16, %s18
      %p277 = scmp.lt.s32.totalorder %s276, 31
      %s278 = scalar_select %p277, %s276, 31
      %s279 = smul.addr %s278, 8
      %s280 = scalar_lea.vmem %s7, %s279
      %s281 = smul.u32 16, %s18
      %v283 = vld [vmem:[%s274] sm:$0xff]
      %v284 = vld [vmem:[%s274 + $0x8] sm:$0xff]
      %v285 = vld [vmem:[%s274 + $0x10] sm:$0xff]
      %v286 = vld [vmem:[%s274 + $0x18] sm:$0xff]
      %v287 = vld [vmem:[%s274 + $0x20] sm:$0xff]
      %v288 = vld [vmem:[%s274 + $0x28] sm:$0xff]
      %v289 = vld [vmem:[%s274 + $0x30] sm:$0xff]
      %v290 = vld [vmem:[%s274 + $0x38] sm:$0xff]
      %v291 = vld [vmem:[%s274 + $0x40] sm:$0xff]
      %v292 = vld [vmem:[%s274 + $0x48] sm:$0xff]
      %v293 = vld [vmem:[%s274 + $0x50] sm:$0xff]
      %v294 = vld [vmem:[%s274 + $0x58] sm:$0xff]
      %v295 = vld [vmem:[%s274 + $0x60] sm:$0xff]
      %v296 = vld [vmem:[%s274 + $0x68] sm:$0xff]
      %v297 = vld [vmem:[%s274 + $0x70] sm:$0xff]
      %v298 = vld [vmem:[%s274 + $0x78] sm:$0xff]
      %v299 = vpack.c.bf16 %v284, %v283
      %v300 = vpack.c.bf16 %v286, %v285
      %v301 = vpack.c.bf16 %v288, %v287
      %v302 = vpack.c.bf16 %v290, %v289
      %v303 = vpack.c.bf16 %v292, %v291
      %v304 = vpack.c.bf16 %v294, %v293
      %v305 = vpack.c.bf16 %v296, %v295
      %v306 = vpack.c.bf16 %v298, %v297
      %v307 = vld [vmem:[%s1] sm:$0xf]
      %v308 = vld [vmem:[%s1 + $0x4] sm:$0xf]
      %v309 = vld [vmem:[%s2] sm:$0x1]
      %v311 = vperm.slane %v309, 0
      %v315 = vunpack.c.l.b16 %v307
      %v316 = vunpack.c.l.b16 %v308
      %v317 = vpack.c.b16 %v316, %v315
      %vm319 = vcmask 130048
      %v321 = vsel %vm319, %v299, 0
      %v324 = vsel %vm319, %v300, 0
      %v327 = vsel %vm319, %v301, 0
      %v330 = vsel %vm319, %v302, 0
      %v333 = vsel %vm319, %v303, 0
      %v336 = vsel %vm319, %v304, 0
      %v339 = vsel %vm319, %v305, 0
      %v342 = vsel %vm319, %v306, 0
      %344 = vmatpush.bf16.msra.mxu0 0
      %345 = vmatpush.bf16.msra.mxu0 0
      %346 = vmatpush.bf16.msra.mxu0 0
      %347 = vmatpush.bf16.msra.mxu0 0
      %348 = vmatpush.bf16.msra.mxu0 0
      %349 = vmatpush.bf16.msra.mxu0 0
      %350 = vmatpush.bf16.msra.mxu0 0
      %351 = vmatpush.bf16.msra.mxu0 %v317
      %352 = vmatmul.bf16.gmra.mxu0 %v321
      %v353 = vpop.f32.mrf.mxu0
      %v354 = vadd.f32 %v311, %v353
      %v355 = vpop.f32.mrf.mxu0
      %v356 = vadd.f32 %v311, %v355
      %357 = vmatmul.bf16.gmra.mxu0 %v324
      %v358 = vpop.f32.mrf.mxu0
      %v359 = vadd.f32 %v311, %v358
      %v360 = vpop.f32.mrf.mxu0
      %v361 = vadd.f32 %v311, %v360
      %362 = vmatmul.bf16.gmra.mxu0 %v327
      %v363 = vpop.f32.mrf.mxu0
      %v364 = vadd.f32 %v311, %v363
      %v365 = vpop.f32.mrf.mxu0
      %v366 = vadd.f32 %v311, %v365
      %367 = vmatmul.bf16.gmra.mxu0 %v330
      %v368 = vpop.f32.mrf.mxu0
      %v369 = vadd.f32 %v311, %v368
      %v370 = vpop.f32.mrf.mxu0
      %v371 = vadd.f32 %v311, %v370
      %372 = vmatmul.bf16.gmra.mxu0 %v333
      %v373 = vpop.f32.mrf.mxu0
      %v374 = vadd.f32 %v311, %v373
      %v375 = vpop.f32.mrf.mxu0
      %v376 = vadd.f32 %v311, %v375
      %377 = vmatmul.bf16.gmra.mxu0 %v336
      %v378 = vpop.f32.mrf.mxu0
      %v379 = vadd.f32 %v311, %v378
      %v380 = vpop.f32.mrf.mxu0
      %v381 = vadd.f32 %v311, %v380
      %382 = vmatmul.bf16.gmra.mxu0 %v339
      %v383 = vpop.f32.mrf.mxu0
      %v384 = vadd.f32 %v311, %v383
      %v385 = vpop.f32.mrf.mxu0
      %v386 = vadd.f32 %v311, %v385
      %387 = vmatmul.bf16.gmra.mxu0 %v342
      %v388 = vpop.f32.mrf.mxu0
      %v389 = vadd.f32 %v311, %v388
      %v390 = vpop.f32.mrf.mxu0
      %v391 = vadd.f32 %v311, %v390
      %392 = vdwg.mxu0
      %v393 = vtanh.pop %v354
      %v394 = vtanh.pop %v356
      %v395 = vtanh.pop %v359
      %v396 = vtanh.pop %v361
      %v397 = vtanh.pop %v364
      %v398 = vtanh.pop %v366
      %v399 = vtanh.pop %v369
      %v400 = vtanh.pop %v371
      %v401 = vtanh.pop %v374
      %v402 = vtanh.pop %v376
      %v403 = vtanh.pop %v379
      %v404 = vtanh.pop %v381
      %v405 = vtanh.pop %v384
      %v406 = vtanh.pop %v386
      %v407 = vtanh.pop %v389
      %v408 = vtanh.pop %v391
      %v409 = vpack.c.bf16 %v394, %v393
      %v410 = vpack.c.bf16 %v396, %v395
      %v411 = vpack.c.bf16 %v398, %v397
      %v412 = vpack.c.bf16 %v400, %v399
      %v413 = vpack.c.bf16 %v402, %v401
      %v414 = vpack.c.bf16 %v404, %v403
      %v415 = vpack.c.bf16 %v406, %v405
      %v416 = vpack.c.bf16 %v408, %v407
      %v417 = vld [vmem:[%s3] sm:$0xf]
      %v418 = vld [vmem:[%s3 + $0x4] sm:$0xf]
      %v419 = vld [vmem:[%s3 + $0x8] sm:$0xf]
      %v420 = vld [vmem:[%s3 + $0xc] sm:$0xf]
      %v421 = vld [vmem:[%s3 + $0x10] sm:$0xf]
      %v422 = vld [vmem:[%s3 + $0x14] sm:$0xf]
      %v423 = vld [vmem:[%s3 + $0x18] sm:$0xf]
      %v424 = vld [vmem:[%s3 + $0x1c] sm:$0xf]
      %v425 = vld [vmem:[%s4] sm:$0x1]
      %v427 = vperm.slane %v425, 0
      %v437 = vunpack.c.l.b16 %v417
      %v438 = vunpack.c.l.b16 %v418
      %v439 = vunpack.c.l.b16 %v419
      %v440 = vunpack.c.l.b16 %v420
      %v441 = vunpack.c.l.b16 %v421
      %v442 = vunpack.c.l.b16 %v422
      %v443 = vunpack.c.l.b16 %v423
      %v444 = vunpack.c.l.b16 %v424
      %v445 = vpack.c.b16 %v438, %v437
      %v446 = vpack.c.b16 %v440, %v439
      %v447 = vpack.c.b16 %v442, %v441
      %v448 = vpack.c.b16 %v444, %v443
      %vm453 = vcmask 523264
      %v455 = vsel %vm453, %v409, 0
      %v458 = vsel %vm453, %v410, 0
      %v461 = vsel %vm453, %v411, 0
      %v464 = vsel %vm453, %v412, 0
      %v467 = vsel %vm453, %v413, 0
      %v470 = vsel %vm453, %v414, 0
      %v473 = vsel %vm453, %v415, 0
      %v476 = vsel %vm453, %v416, 0
      %478 = vmatpush.bf16.msra.mxu0 0
      %479 = vmatpush.bf16.msra.mxu0 0
      %480 = vmatpush.bf16.msra.mxu0 0
      %481 = vmatpush.bf16.msra.mxu0 0
      %482 = vmatpush.bf16.msra.mxu0 %v448
      %483 = vmatpush.bf16.msra.mxu0 %v447
      %484 = vmatpush.bf16.msra.mxu0 %v446
      %485 = vmatpush.bf16.msra.mxu0 %v445
      %486 = vmatmul.bf16.gmra.mxu0 %v455
      %v487 = vpop.f32.mrf.mxu0
      %v488 = vadd.f32 %v427, %v487
      %v489 = vpop.f32.mrf.mxu0
      %v490 = vadd.f32 %v427, %v489
      %491 = vmatmul.bf16.gmra.mxu0 %v458
      %v492 = vpop.f32.mrf.mxu0
      %v493 = vadd.f32 %v427, %v492
      %v494 = vpop.f32.mrf.mxu0
      %v495 = vadd.f32 %v427, %v494
      %496 = vmatmul.bf16.gmra.mxu0 %v461
      %v497 = vpop.f32.mrf.mxu0
      %v498 = vadd.f32 %v427, %v497
      %v499 = vpop.f32.mrf.mxu0
      %v500 = vadd.f32 %v427, %v499
      %501 = vmatmul.bf16.gmra.mxu0 %v464
      %v502 = vpop.f32.mrf.mxu0
      %v503 = vadd.f32 %v427, %v502
      %v504 = vpop.f32.mrf.mxu0
      %v505 = vadd.f32 %v427, %v504
      %506 = vmatmul.bf16.gmra.mxu0 %v467
      %v507 = vpop.f32.mrf.mxu0
      %v508 = vadd.f32 %v427, %v507
      %v509 = vpop.f32.mrf.mxu0
      %v510 = vadd.f32 %v427, %v509
      %511 = vmatmul.bf16.gmra.mxu0 %v470
      %v512 = vpop.f32.mrf.mxu0
      %v513 = vadd.f32 %v427, %v512
      %v514 = vpop.f32.mrf.mxu0
      %v515 = vadd.f32 %v427, %v514
      %516 = vmatmul.bf16.gmra.mxu0 %v473
      %v517 = vpop.f32.mrf.mxu0
      %v518 = vadd.f32 %v427, %v517
      %v519 = vpop.f32.mrf.mxu0
      %v520 = vadd.f32 %v427, %v519
      %521 = vmatmul.bf16.gmra.mxu0 %v476
      %v522 = vpop.f32.mrf.mxu0
      %v523 = vadd.f32 %v427, %v522
      %v524 = vpop.f32.mrf.mxu0
      %v525 = vadd.f32 %v427, %v524
      %526 = vdwg.mxu0
      %v527 = vtanh.pop %v488
      %v528 = vtanh.pop %v490
      %v529 = vtanh.pop %v493
      %v530 = vtanh.pop %v495
      %v531 = vtanh.pop %v498
      %v532 = vtanh.pop %v500
      %v533 = vtanh.pop %v503
      %v534 = vtanh.pop %v505
      %v535 = vtanh.pop %v508
      %v536 = vtanh.pop %v510
      %v537 = vtanh.pop %v513
      %v538 = vtanh.pop %v515
      %v539 = vtanh.pop %v518
      %v540 = vtanh.pop %v520
      %v541 = vtanh.pop %v523
      %v542 = vtanh.pop %v525
      %v543 = vpack.c.bf16 %v528, %v527
      %v544 = vpack.c.bf16 %v530, %v529
      %v545 = vpack.c.bf16 %v532, %v531
      %v546 = vpack.c.bf16 %v534, %v533
      %v547 = vpack.c.bf16 %v536, %v535
      %v548 = vpack.c.bf16 %v538, %v537
      %v549 = vpack.c.bf16 %v540, %v539
      %v550 = vpack.c.bf16 %v542, %v541
      %v551 = vld [vmem:[%s5] sm:$0xf]
      %v552 = vld [vmem:[%s5 + $0x4] sm:$0xf]
      %v553 = vld [vmem:[%s5 + $0x8] sm:$0xf]
      %v554 = vld [vmem:[%s5 + $0xc] sm:$0xf]
      %v555 = vld [vmem:[%s5 + $0x10] sm:$0xf]
      %v556 = vld [vmem:[%s5 + $0x14] sm:$0xf]
      %v557 = vld [vmem:[%s5 + $0x18] sm:$0xf]
      %v558 = vld [vmem:[%s5 + $0x1c] sm:$0xf]
      %v559 = vld [vmem:[%s6] sm:$0x1]
      %v561 = vperm.slane %v559, 0
      %v571 = vunpack.c.l.b16 %v551
      %v572 = vunpack.c.l.b16 %v552
      %v573 = vunpack.c.l.b16 %v553
      %v574 = vunpack.c.l.b16 %v554
      %v575 = vunpack.c.l.b16 %v555
      %v576 = vunpack.c.l.b16 %v556
      %v577 = vunpack.c.l.b16 %v557
      %v578 = vunpack.c.l.b16 %v558
      %v579 = vpack.c.b16 %v572, %v571
      %v580 = vpack.c.b16 %v574, %v573
      %v581 = vpack.c.b16 %v576, %v575
      %v582 = vpack.c.b16 %v578, %v577
      %v588 = vsel %vm453, %v543, 0
      %v591 = vsel %vm453, %v544, 0
      %v594 = vsel %vm453, %v545, 0
      %v597 = vsel %vm453, %v546, 0
      %v600 = vsel %vm453, %v547, 0
      %v603 = vsel %vm453, %v548, 0
      %v606 = vsel %vm453, %v549, 0
      %v609 = vsel %vm453, %v550, 0
      %611 = vmatpush.bf16.msra.mxu0 0
      %612 = vmatpush.bf16.msra.mxu0 0
      %613 = vmatpush.bf16.msra.mxu0 0
      %614 = vmatpush.bf16.msra.mxu0 0
      %615 = vmatpush.bf16.msra.mxu0 %v582
      %616 = vmatpush.bf16.msra.mxu0 %v581
      %617 = vmatpush.bf16.msra.mxu0 %v580
      %618 = vmatpush.bf16.msra.mxu0 %v579
      %619 = vmatmul.bf16.gmra.mxu0 %v588
      %v620 = vpop.f32.mrf.mxu0
      %v621 = vadd.f32 %v561, %v620
      %v622 = vpop.f32.mrf.mxu0
      %v623 = vadd.f32 %v561, %v622
      %624 = vmatmul.bf16.gmra.mxu0 %v591
      %v625 = vpop.f32.mrf.mxu0
      %v626 = vadd.f32 %v561, %v625
      %v627 = vpop.f32.mrf.mxu0
      %v628 = vadd.f32 %v561, %v627
      %629 = vmatmul.bf16.gmra.mxu0 %v594
      %v630 = vpop.f32.mrf.mxu0
      %v631 = vadd.f32 %v561, %v630
      %v632 = vpop.f32.mrf.mxu0
      %v633 = vadd.f32 %v561, %v632
      %634 = vmatmul.bf16.gmra.mxu0 %v597
      %v635 = vpop.f32.mrf.mxu0
      %v636 = vadd.f32 %v561, %v635
      %v637 = vpop.f32.mrf.mxu0
      %v638 = vadd.f32 %v561, %v637
      %639 = vmatmul.bf16.gmra.mxu0 %v600
      %v640 = vpop.f32.mrf.mxu0
      %v641 = vadd.f32 %v561, %v640
      %v642 = vpop.f32.mrf.mxu0
      %v643 = vadd.f32 %v561, %v642
      %644 = vmatmul.bf16.gmra.mxu0 %v603
      %v645 = vpop.f32.mrf.mxu0
      %v646 = vadd.f32 %v561, %v645
      %v647 = vpop.f32.mrf.mxu0
      %v648 = vadd.f32 %v561, %v647
      %649 = vmatmul.bf16.gmra.mxu0 %v606
      %v650 = vpop.f32.mrf.mxu0
      %v651 = vadd.f32 %v561, %v650
      %v652 = vpop.f32.mrf.mxu0
      %v653 = vadd.f32 %v561, %v652
      %654 = vmatmul.bf16.gmra.mxu0 %v609
      %v655 = vpop.f32.mrf.mxu0
      %v656 = vadd.f32 %v561, %v655
      %v657 = vpop.f32.mrf.mxu0
      %v658 = vadd.f32 %v561, %v657
      %659 = vdwg.mxu0
      %vm660 = vcmask 80896
      %661 = vst.msk [vmem:[%s280] sm:$0xff] %vm660, %v621
      %662 = vst.msk [vmem:[%s280 + $0x8] sm:$0xff] %vm660, %v623
      %663 = vst.msk [vmem:[%s280 + $0x10] sm:$0xff] %vm660, %v626
      %664 = vst.msk [vmem:[%s280 + $0x18] sm:$0xff] %vm660, %v628
      %665 = vst.msk [vmem:[%s280 + $0x20] sm:$0xff] %vm660, %v631
      %666 = vst.msk [vmem:[%s280 + $0x28] sm:$0xff] %vm660, %v633
      %667 = vst.msk [vmem:[%s280 + $0x30] sm:$0xff] %vm660, %v636
      %668 = vst.msk [vmem:[%s280 + $0x38] sm:$0xff] %vm660, %v638
      %669 = vst.msk [vmem:[%s280 + $0x40] sm:$0xff] %vm660, %v641
      %670 = vst.msk [vmem:[%s280 + $0x48] sm:$0xff] %vm660, %v643
      %671 = vst.msk [vmem:[%s280 + $0x50] sm:$0xff] %vm660, %v646
      %672 = vst.msk [vmem:[%s280 + $0x58] sm:$0xff] %vm660, %v648
      %673 = vst.msk [vmem:[%s280 + $0x60] sm:$0xff] %vm660, %v651
      %674 = vst.msk [vmem:[%s280 + $0x68] sm:$0xff] %vm660, %v653
      %675 = vst.msk [vmem:[%s280 + $0x70] sm:$0xff] %vm660, %v656
      %676 = vst.msk [vmem:[%s280 + $0x78] sm:$0xff] %vm660, %v658
      %s677 = smul.u32 16, %s18
      %p678 = scmp.lt.s32.totalorder %s677, 31
      %s679 = scalar_select %p678, %s677, 31
      %s680 = smul.addr %s679, 8
      %s681 = scalar_lea.vmem %s7, %s680
      // Predicated region
      $region49: #{tpu_custom_call.1} parent=47 // pred_check
        %p682 = pneg %p188
      $region50: #{tpu_custom_call.1} parent=47 // pred_check_branch
        %684 = sbr.rel (%p682) target = $region52
      $region51: #{tpu_custom_call.1} parent=47 // pred_region
        %s685 = smul.u32 16, %s18
      $region52: #{tpu_custom_call.1} parent=47 // pred_fallthru
        _
    $region48: #{tpu_custom_call.1} parent=5 // pred_fallthru
      _
    %p686 = scmp.le.s32.totalorder 2, %s13
    // Predicated region
    $region53: #{tpu_custom_call.1} parent=5 // pred_check
      %p687 = pneg %p686
    $region54: #{tpu_custom_call.1} parent=5 // pred_check_branch
      %689 = sbr.rel (%p687) target = $region56
    $region55: #{tpu_custom_call.1} parent=5 // pred_region
      %s690 = ssub.s32 %s13, 2
      // Predicated region
      $region57: #{tpu_custom_call.1} parent=55 // pred_check
        %p691 = pneg %p194
      $region58: #{tpu_custom_call.1} parent=55 // pred_check_branch
        %693 = sbr.rel (%p691) target = $region60
      $region59: #{tpu_custom_call.1} parent=55 // pred_region
        %s694 = smul.u32 16, %s19
        %p695 = scmp.lt.s32.totalorder %s694, 31
        %s696 = scalar_select %p695, %s694, 31
        %s697 = smul.addr %s696, 8
        %s698 = scalar_lea.vmem %s7, %s697
      $region60: #{tpu_custom_call.1} parent=55 // pred_fallthru
        _
    $region56: #{tpu_custom_call.1} parent=5 // pred_fallthru
      _
  $region6: #{tpu_custom_call.1} parent=0 // loop_footer
    %s17 = sadd.s32 1, %s13
  $region7: #{tpu_custom_call.1} parent=0 // loop_footer_branch
    %12 = sbr.rel target = $region3
  $region8: #{tpu_custom_call.1} parent=0 // loop_exit
    _

</llo_original>
